<compile_context>
chip_gen: v6e
topology: v6e:2x2x1
jax: 0.10.0
libtpu: 0.0.40
codegen_flags: <defaults>
</compile_context>

<pallas_src>
import functools

import jax
import jax.numpy as jnp
import numpy as np
from jax.experimental import pallas as pl
from jax.experimental.pallas import tpu as pltpu

LAMBDA_MAG = 1.0
LAMBDA_SC = 0.5
EPS = 1e-8


# --------------------------------------------------------------------------
# Kernel bodies: each grid step reduces its (Bt, tF, T) block over (Bt, tF)
# and writes one fused (1, 1, 3, T) partial-sum slab (lane/T axis un-reduced).
#   channel 0: sum |p - t|            (* mask)
#   channel 1: sum (e^t - e^p)^2      (* mask)
#   channel 2: sum (e^t + eps)^2      (* mask)
# --------------------------------------------------------------------------
def _masked_sums_kernel(pred_ref, targ_ref, mask_ref, out_ref, *, eps):
    T = pred_ref.shape[-1]
    p = pred_ref[...].astype(jnp.float32)            # (Bt, tF, T)
    t = targ_ref[...].astype(jnp.float32)            # (Bt, tF, T)
    m = mask_ref[...].astype(jnp.float32)[:, 0, :]   # (Bt, T)

    abs_diff = jnp.abs(p - t)
    exp_p = jnp.exp(p)
    exp_t = jnp.exp(t)
    diff = exp_t - exp_p                             # (+eps terms cancel exactly)
    targ_mag = exp_t + eps

    # Reduce over the F tile (sublanes) first, apply the mask once per (b, t)
    # column, then reduce over the batch tile; keep the lane (T) axis.
    s_abs = jnp.sum(jnp.sum(abs_diff, axis=1) * m, axis=0, keepdims=True)       # (1,T)
    s_sq = jnp.sum(jnp.sum(diff * diff, axis=1) * m, axis=0, keepdims=True)     # (1,T)
    s_tm = jnp.sum(jnp.sum(targ_mag * targ_mag, axis=1) * m, axis=0,
                   keepdims=True)                                               # (1,T)

    out_ref[...] = jnp.concatenate([s_abs, s_sq, s_tm], axis=0).reshape(1, 1, 3, T)


def _unmasked_sums_kernel(pred_ref, targ_ref, out_ref, *, eps):
    T = pred_ref.shape[-1]
    p = pred_ref[...].astype(jnp.float32)            # (Bt, tF, T)
    t = targ_ref[...].astype(jnp.float32)

    abs_diff = jnp.abs(p - t)
    exp_p = jnp.exp(p)
    exp_t = jnp.exp(t)
    diff = exp_t - exp_p
    targ_mag = exp_t + eps

    # Single fused reduction over (batch-tile, F-tile); keep the lane axis.
    s_abs = jnp.sum(abs_diff, axis=(0, 1), keepdims=True).reshape(1, T)
    s_sq = jnp.sum(diff * diff, axis=(0, 1), keepdims=True).reshape(1, T)
    s_tm = jnp.sum(targ_mag * targ_mag, axis=(0, 1), keepdims=True).reshape(1, T)

    out_ref[...] = jnp.concatenate([s_abs, s_sq, s_tm], axis=0).reshape(1, 1, 3, T)


# --------------------------------------------------------------------------
# Tiling heuristics + VMEM budgeting
# --------------------------------------------------------------------------
def _largest_divisor_leq(n, cap):
    cap = int(max(1, min(n, cap)))
    best = 1
    d = 1
    while d * d <= n:
        if n % d == 0:
            if d <= cap and d > best:
                best = d
            q = n // d
            if q <= cap and q > best:
                best = q
        d += 1
    return best


def _vmem_capacity_bytes():
    """Per-core VMEM capacity; conservative fallback is v7x's 64 MiB per TC."""
    try:
        cap = int(getattr(pltpu.get_tpu_info(), "vmem_capacity_bytes", 0))
        if cap > 0:
            return cap
    except Exception:
        pass
    return 64 << 20


def _pick_tiles(B, F, T, itemsize, target_bytes):
    """Pick (Bt, tF) so one (Bt, tF, T) input block is <= ~target_bytes.

    T is never tiled: blocks stay contiguous in HBM and the last block dim
    always equals the full array dim.  tF is kept sublane-aligned for the
    input dtype (8 for f32, 16 for bf16) or equal to full F.
    """
    sub = max(8, 32 // itemsize)            # sublane multiple for this dtype
    row = T * itemsize                      # bytes of one contiguous (f, :) row
    slab = F * row                          # one full (F, T) slab per batch
    if slab <= target_bytes:
        # Small slabs: fold several batches into one block, keep full F.
        Bt = _largest_divisor_leq(B, max(1, target_bytes // slab))
        tF = F
    else:
        # Large slabs: one batch per block, tile F in sublane-aligned chunks.
        Bt = 1
        cap_f = max(sub, target_bytes // max(row, 1))
        if F % sub == 0:
            tF = _largest_divisor_leq(F // sub, cap_f // sub) * sub
        else:
            tF = F  # F not sublane-tileable: take the whole slab (rare)
    return Bt, tF, sub


def _ensure_two_steps(B, F, Bt, tF, sub):
    """If the grid would be (1, 1), split one axis so both v7x TCs get work."""
    if (B // Bt) * (F // tF) >= 2:
        return Bt, tF
    if Bt % 2 == 0:
        return Bt // 2, tF
    if tF % (2 * sub) == 0:
        return Bt, tF // 2
    return Bt, tF


# --------------------------------------------------------------------------
# pallas_call wrapper: per-block partial sums + JAX tree-sum
# --------------------------------------------------------------------------
def _partial_sums(pred_log, target_log, mask_b1t, eps, block_target_bytes):
    B, F, T = pred_log.shape
    itemsize = jnp.dtype(pred_log.dtype).itemsize
    vmem_cap = _vmem_capacity_bytes()

    if block_target_bytes is None:
        # Budget per step: 2 inputs x 2 pipeline buffers (input dtype) plus
        # ~5 live block-sized f32 elementwise temporaries in the body; keep
        # the whole pipeline within ~half the per-core VMEM.
        units = 4.0 + 5.0 * (4.0 / itemsize)
        block_target_bytes = int((vmem_cap // 2) / units)
        block_target_bytes = max(512 << 10, min(4 << 20, block_target_bytes))

    Bt, tF, sub = _pick_tiles(B, F, T, itemsize, block_target_bytes)
    Bt, tF = _ensure_two_steps(B, F, Bt, tF, sub)
    nB, nF = B // Bt, F // tF

    # Explicit VMEM limit: double-buffered inputs + f32 body temporaries
    # + mask/output buffers and compiler slack.  Never above physical VMEM.
    block_elems = Bt * tF * T
    vmem_limit = (4 * block_elems * itemsize      # 2 inputs x 2 buffers
                  + 6 * block_elems * 4           # f32 body temporaries
                  + (8 << 20))                    # mask/output/internal slack
    vmem_limit = int(min(max(vmem_limit, 32 << 20), vmem_cap))

    data_spec = pl.BlockSpec((Bt, tF, T), lambda i, j: (i, j, 0))
    out_sds = jax.ShapeDtypeStruct((nB, nF, 3, T), jnp.float32)
    out_spec = pl.BlockSpec((1, 1, 3, T), lambda i, j: (i, j, 0, 0))

    if mask_b1t is None:
        kernel = functools.partial(_unmasked_sums_kernel, eps=eps)
        in_specs = [data_spec, data_spec]
        args = (pred_log, target_log)
        mask_bytes = 0
    else:
        kernel = functools.partial(_masked_sums_kernel, eps=eps)
        # Mask block does not depend on the F-tile index j.
        in_specs = [data_spec, data_spec,
                    pl.BlockSpec((Bt, 1, T), lambda i, j: (i, 0, 0))]
        args = (pred_log, target_log, mask_b1t)
        mask_bytes = B * T * 4 * nF   # re-read once per F tile

    n = B * F * T
    cost = pl.CostEstimate(
        flops=int(9 * n),
        transcendentals=int(2 * n),
        bytes_accessed=int(2 * n * itemsize + mask_bytes + nB * nF * 3 * T * 4),
    )

    parts = pl.pallas_call(
        kernel,
        out_shape=out_sds,
        grid_spec=pltpu.PrefetchScalarGridSpec(
            num_scalar_prefetch=0,
            grid=(nB, nF),
            in_specs=in_specs,
            out_specs=out_spec,
        ),
        compiler_params=pltpu.CompilerParams(
            dimension_semantics=("parallel", "parallel"),
            vmem_limit_bytes=vmem_limit),
        cost_estimate=cost,
    )(*args)

    # Final cross-block / cross-lane reduction: a tree-sum in plain JAX.
    sums = jnp.sum(parts, axis=(0, 1, 3))   # (3,)
    return sums[0], sums[1], sums[2]


def stft_log_loss(pred_log, target_log, mask=None,
                  lam_mag=LAMBDA_MAG, lam_sc=LAMBDA_SC, eps=EPS,
                  block_target_bytes=None):
    """Matches STFTLogLoss.forward.

    pred_log/target_log: (B, F, T) float32 or bfloat16; mask: (B, T) or None.
    """
    B, F, T = pred_log.shape
    if mask is None:
        s_abs, s_sq, s_tm = _partial_sums(
            pred_log, target_log, None, eps, block_target_bytes)
        mag_loss = s_abs / jnp.float32(B * F * T)              # F.l1_loss mean
        sc_loss = jnp.sqrt(s_sq) / (jnp.sqrt(s_tm) + eps)      # fro-norm ratio
    else:
        m = mask.astype(jnp.float32).reshape(B, 1, T)
        s_abs, s_sq, s_tm = _partial_sums(
            pred_log, target_log, m, eps, block_target_bytes)
        # Denominator computed outside the kernel (tiny, and tiling-agnostic).
        mag_loss = s_abs / (jnp.sum(m) + eps)
        sc_loss = jnp.sqrt(s_sq / (s_tm + eps))
    return lam_mag * mag_loss + lam_sc * sc_loss


# --------------------------------------------------------------------------
# Pure-JAX reference mirroring the PyTorch forward
# --------------------------------------------------------------------------
def stft_log_loss_ref(pred_log, target_log, mask=None,
                      lam_mag=LAMBDA_MAG, lam_sc=LAMBDA_SC, eps=EPS):
    if mask is not None:
        m = mask[:, None, :].astype(jnp.float32)               # (B,1,T)
        l1_diff = jnp.abs(pred_log - target_log)
        mag_loss = jnp.sum(l1_diff * m) / (jnp.sum(m) + eps)
        pred_mag = jnp.exp(pred_log) + eps
        targ_mag = jnp.exp(target_log) + eps
        diff = (targ_mag - pred_mag) ** 2
        sc_numer = jnp.sum(diff * m)
        sc_denom = jnp.sum(targ_mag ** 2 * m) + eps
        sc_loss = jnp.sqrt(sc_numer / sc_denom)
    else:
        mag_loss = jnp.mean(jnp.abs(pred_log - target_log))
        pred_mag = jnp.exp(pred_log) + eps
        targ_mag = jnp.exp(target_log) + eps
        sc_loss = jnp.linalg.norm(targ_mag - pred_mag) / (jnp.linalg.norm(targ_mag) + eps)
    return lam_mag * mag_loss + lam_sc * sc_loss


if __name__ == "__main__":
    key = jax.random.PRNGKey(0)

    def run_case(B, F, T, dtype, block_target_bytes):
        k1, k2, k3 = jax.random.split(jax.random.fold_in(key, B * 100000 + F * 1000 + T), 3)
        pred_log = (0.5 * jax.random.normal(k1, (B, F, T))).astype(dtype)
        target_log = (0.5 * jax.random.normal(k2, (B, F, T))).astype(dtype)
        mask = (jax.random.uniform(k3, (B, T)) > 0.3).astype(jnp.float32)

        # Reference sees the same f32 values the kernel computes with.
        pred_f32 = pred_log.astype(jnp.float32)
        targ_f32 = target_log.astype(jnp.float32)

        # masked path
        out_m = jax.block_until_ready(
            stft_log_loss(pred_log, target_log, mask,
                          block_target_bytes=block_target_bytes))
        ref_m = stft_log_loss_ref(pred_f32, targ_f32, mask)
        np.testing.assert_allclose(np.asarray(out_m), np.asarray(ref_m),
                                   rtol=1e-5, atol=1e-6)

        # unmasked path
        out_u = jax.block_until_ready(
            stft_log_loss(pred_log, target_log, None,
                          block_target_bytes=block_target_bytes))
        ref_u = stft_log_loss_ref(pred_f32, targ_f32, None)
        np.testing.assert_allclose(np.asarray(out_u), np.asarray(ref_u),
                                   rtol=1e-5, atol=1e-6)

    # Small slabs, auto block target: whole problem fits one block, but the
    # two-step rule splits the batch -> grid (2, 1) so both v7x TCs get work.
    run_case(B=2, F=16, T=128, dtype=jnp.float32, block_target_bytes=None)
    # Non-128-multiple T kept whole (contiguous blocks, no lane-tiling issues);
    # tiny block budget forces F-tiling (tF=8) -> grid (2, 3).
    run_case(B=2, F=24, T=200, dtype=jnp.float32, block_target_bytes=8 * 1024)
    # bf16 inputs (half the HBM traffic): 16-aligned F tiles (tF=32) -> grid (2, 2).
    run_case(B=2, F=64, T=256, dtype=jnp.bfloat16, block_target_bytes=16 * 1024)

    print("KERNEL_OK")
</pallas_src>

<mosaic_0001>
module attributes {stable_mosaic.version = 11 : i64} {
  func.func @_masked_sums_kernel(%arg0: i32, %arg1: i32, %arg2: memref<1x16x128xf32, #tpu.memory_space<vmem>>, %arg3: memref<1x16x128xf32, #tpu.memory_space<vmem>>, %arg4: memref<1x1x128xf32, #tpu.memory_space<vmem>>, %arg5: memref<1x1x3x128xf32, #tpu.memory_space<vmem>>) attributes {dimension_semantics = [#tpu.dimension_semantics<parallel>, #tpu.dimension_semantics<parallel>], iteration_bounds = array<i64: 2, 1>, scalar_prefetch = 0 : i64, scratch_operands = 0 : i64, tpu.core_type = #tpu.core_type<tc>, window_params = [{transform_indices = @transform_0, window_bounds = array<i64: 1, 16, 128>}, {transform_indices = @transform_1, window_bounds = array<i64: 1, 16, 128>}, {transform_indices = @transform_2, window_bounds = array<i64: 1, 1, 128>}, {transform_indices = @transform_3, window_bounds = array<i64: 1, 1, 3, 128>}]} {
    %c0 = arith.constant 0 : index
    %c0_0 = arith.constant 0 : index
    %c0_1 = arith.constant 0 : index
    %0 = vector.load %arg2[%c0, %c0_0, %c0_1] : memref<1x16x128xf32, #tpu.memory_space<vmem>>, vector<1x16x128xf32>
    %c0_2 = arith.constant 0 : index
    %c0_3 = arith.constant 0 : index
    %c0_4 = arith.constant 0 : index
    %1 = vector.load %arg3[%c0_2, %c0_3, %c0_4] : memref<1x16x128xf32, #tpu.memory_space<vmem>>, vector<1x16x128xf32>
    %c0_5 = arith.constant 0 : index
    %c0_6 = arith.constant 0 : index
    %c0_7 = arith.constant 0 : index
    %2 = vector.load %arg4[%c0_5, %c0_6, %c0_7] : memref<1x1x128xf32, #tpu.memory_space<vmem>>, vector<1x1x128xf32>
    %3 = vector.shape_cast %2 : vector<1x1x128xf32> to vector<1x128xf32>
    %4 = arith.subf %0, %1 : vector<1x16x128xf32>
    %5 = math.absf %4 : vector<1x16x128xf32>
    %6 = math.exp %0 : vector<1x16x128xf32>
    %7 = math.exp %1 : vector<1x16x128xf32>
    %8 = arith.subf %7, %6 : vector<1x16x128xf32>
    %cst = arith.constant 9.99999993E-9 : f32
    %9 = vector.broadcast %cst : f32 to vector<1x16x128xf32>
    %10 = arith.addf %7, %9 : vector<1x16x128xf32>
    %cst_8 = arith.constant dense<0.000000e+00> : vector<1x128xf32>
    %11 = vector.multi_reduction <add>, %5, %cst_8 [1] : vector<1x16x128xf32> to vector<1x128xf32>
    %12 = arith.mulf %11, %3 : vector<1x128xf32>
    %cst_9 = arith.constant dense<0.000000e+00> : vector<128xf32>
    %13 = vector.multi_reduction <add>, %12, %cst_9 [0] : vector<1x128xf32> to vector<128xf32>
    %14 = vector.shape_cast %13 : vector<128xf32> to vector<1x128xf32>
    %15 = arith.mulf %8, %8 : vector<1x16x128xf32>
    %cst_10 = arith.constant dense<0.000000e+00> : vector<1x128xf32>
    %16 = vector.multi_reduction <add>, %15, %cst_10 [1] : vector<1x16x128xf32> to vector<1x128xf32>
    %17 = arith.mulf %16, %3 : vector<1x128xf32>
    %cst_11 = arith.constant dense<0.000000e+00> : vector<128xf32>
    %18 = vector.multi_reduction <add>, %17, %cst_11 [0] : vector<1x128xf32> to vector<128xf32>
    %19 = vector.shape_cast %18 : vector<128xf32> to vector<1x128xf32>
    %20 = arith.mulf %10, %10 : vector<1x16x128xf32>
    %cst_12 = arith.constant dense<0.000000e+00> : vector<1x128xf32>
    %21 = vector.multi_reduction <add>, %20, %cst_12 [1] : vector<1x16x128xf32> to vector<1x128xf32>
    %22 = arith.mulf %21, %3 : vector<1x128xf32>
    %cst_13 = arith.constant dense<0.000000e+00> : vector<128xf32>
    %23 = vector.multi_reduction <add>, %22, %cst_13 [0] : vector<1x128xf32> to vector<128xf32>
    %24 = vector.shape_cast %23 : vector<128xf32> to vector<1x128xf32>
    %25 = tpu.concatenate %14, %19, %24 in 0 : vector<1x128xf32>, vector<1x128xf32>, vector<1x128xf32> -> vector<3x128xf32>
    %26 = vector.shape_cast %25 : vector<3x128xf32> to vector<1x1x3x128xf32>
    %c0_14 = arith.constant 0 : index
    %c0_15 = arith.constant 0 : index
    %c0_16 = arith.constant 0 : index
    %c0_17 = arith.constant 0 : index
    %27 = vector.load %arg5[%c0_14, %c0_15, %c0_16, %c0_17] : memref<1x1x3x128xf32, #tpu.memory_space<vmem>>, vector<1x1x3x128xf32>
    tpu.vector_store %arg5[%c0_14, %c0_15, %c0_16, %c0_17], %26 {strides = array<i32>} : memref<1x1x3x128xf32, #tpu.memory_space<vmem>>, vector<1x1x3x128xf32>,
    return
  }
  func.func @transform_0(%arg0: i32, %arg1: i32) -> (i32, i32, i32) {
    %c0_i32 = arith.constant 0 : i32
    %c0_i32_0 = arith.constant 0 : i32
    return %arg0, %arg1, %c0_i32 : i32, i32, i32
  }
  func.func @transform_1(%arg0: i32, %arg1: i32) -> (i32, i32, i32) {
    %c0_i32 = arith.constant 0 : i32
    %c0_i32_0 = arith.constant 0 : i32
    return %arg0, %arg1, %c0_i32 : i32, i32, i32
  }
  func.func @transform_2(%arg0: i32, %arg1: i32) -> (i32, i32, i32) {
    %c0_i32 = arith.constant 0 : i32
    %c0_i32_0 = arith.constant 0 : i32
    %c0_i32_1 = arith.constant 0 : i32
    return %arg0, %c0_i32, %c0_i32_0 : i32, i32, i32
  }
  func.func @transform_3(%arg0: i32, %arg1: i32) -> (i32, i32, i32, i32) {
    %c0_i32 = arith.constant 0 : i32
    %c0_i32_0 = arith.constant 0 : i32
    %c0_i32_1 = arith.constant 0 : i32
    return %arg0, %arg1, %c0_i32, %c0_i32_0 : i32, i32, i32, i32
  }
}

</mosaic_0001>

<llo_original>
// kernel: tpu_custom_call.1
$region0: #{tpu_custom_call.1}
  #allocation0 [shape = 'u32[]', space=smem, size = 0x4, offset = 0x4, fixed_abs, tag = 'smem constant byte address 0x4 - core index']
  #allocation1 [shape = 'u32[144,128]{1,0:T(1,128)}', space=vmem, size = 0x12000, scoped, tag = 'internal scratch']
  %s0 = inlined_call_operand.hbm [shape: f32[2,16,128], index: 0, kind: input, shape index: {}]
  %s1 = inlined_call_operand.hbm [shape: f32[2,16,128], index: 1, kind: input, shape index: {}]
  %s2 = inlined_call_operand.vmem [shape: f32[2,1,128], index: 2, kind: input, shape index: {}]
  %s3 = inlined_call_operand.vmem [shape: f32[2,1,3,128], index: 3, kind: output, shape index: {}]
  %s4 = sld [smem:[#allocation0]]
  $region53: #{tpu_custom_call.1} parent=0
    _
  %s6 = ssub.s32 1, %s4
  %s7 = scalar_select 0, %s6, %s4
  $region1: #{tpu_custom_call.1} parent=0
    #allocation2 [shape = 'u8[16384]{0}', space=vmem, size = 0x4000, scoped, tag = 'input window, operand 0']
    #allocation3 [shape = 's32[2]{0}', space=sflag, size = 0x8, scoped, tag = 'scoped memory for tpu_custom_call.1']
    #allocation4 [shape = 'u8[16384]{0}', space=vmem, size = 0x4000, scoped, tag = 'input window, operand 1']
    #allocation5 [shape = 's32[2]{0}', space=sflag, size = 0x8, scoped, tag = 'scoped memory for tpu_custom_call.1']
    %8 = vsyncpa [#allocation3], 0
    %s9 = scalar_lea.sflag [#allocation3], 1
    %10 = vsyncpa %s9, 0
    %11 = vsyncpa [#allocation5], 0
    %s12 = scalar_lea.sflag [#allocation5], 1
    %13 = vsyncpa %s12, 0
    loop: start=0, step=1, limit=4
    $region2: #{tpu_custom_call.1} parent=1 // loop_pre_header
      _
    $region3: #{tpu_custom_call.1} parent=1 // loop_header
      %s15 = sphi 0, %s19
      %p16 = scmp.ge.s32.totalorder %s15, 4
      %s22 = sphi 0, %s34
      %s23 = sphi 0, %s30
      %s24 = sphi 0, %s22
      %s25 = sphi 0, %s23
      %s26 = sphi 0, %s24
      %s27 = sphi 0, %s25
      %s39 = sphi 0, %s41
      %s42 = sphi 0, %s39
      %s43 = sphi 0, %s42
      %s59 = sphi 0, %s43
      %s67 = sphi 0, %s69
      %s70 = sphi 0, %s67
      %s71 = sphi 0, %s70
      %s87 = sphi 0, %s71
      %s93 = sphi 0, %s95
      %s96 = sphi 0, %s93
      %s97 = sphi 0, %s96
      %s113 = sphi 0, %s97
      %s121 = sphi 0, %s123
      %s124 = sphi 0, %s121
      %s125 = sphi 0, %s124
      %s141 = sphi 0, %s125
    $region4: #{tpu_custom_call.1} parent=1 // loop_header_branch
      %18 = sbr.rel (%p16) target = $region8
    $region5: #{tpu_custom_call.1} parent=1 // loop_body
      %s20 = ssub.s32 %s15, 1
      %s21 = ssub.s32 %s15, 2
      %s28 = sadd.s32 1, %s23
      %p29 = scmp.ge.s32.totalorder %s28, 1
      %s30 = scalar_select %p29, 0, %s28
      %s31 = sadd.s32 1, %s22
      %s32 = scalar_select %p29, %s31, %s22
      %p33 = scmp.ge.s32.totalorder %s32, 2
      %s34 = scalar_select %p33, 0, %s32
      %s35 = ssub.s32 %s22, %s34
      %s36 = ssub.s32 %s23, %s30
      %s37 = sor.u32 %s35, %s36
      %p38 = scmp.eq.s32.totalorder %s37, 0
      %s40 = sadd.s32 %s39, 1
      %s41 = scalar_select %p38, %s39, %s40
      %p44 = pneg %p38
      %p45 = scmp.eq.s32.totalorder %s15, 1
      %p46 = por %p44, %p45
      %p47 = scmp.ne.s32.totalorder %s39, %s42
      %p48 = scmp.eq.s32.totalorder %s15, 0
      %p49 = por %p47, %p48
      %p50 = scmp.ne.s32.totalorder %s39, %s42
      %p51 = scmp.eq.s32.totalorder %s20, 1
      %p52 = por %p50, %p51
      %p53 = scmp.ne.s32.totalorder %s42, %s43
      %p54 = scmp.eq.s32.totalorder %s20, 0
      %p55 = por %p53, %p54
      %p56 = scmp.ne.s32.totalorder %s42, %s43
      %p57 = scmp.eq.s32.totalorder %s21, 1
      %p58 = por %p56, %p57
      %p60 = scmp.ne.s32.totalorder %s43, %s59
      %p61 = scmp.eq.s32.totalorder %s21, 0
      %p62 = por %p60, %p61
      %s63 = ssub.s32 %s22, %s34
      %s64 = ssub.s32 %s23, %s30
      %s65 = sor.u32 %s63, %s64
      %p66 = scmp.eq.s32.totalorder %s65, 0
      %s68 = sadd.s32 %s67, 1
      %s69 = scalar_select %p66, %s67, %s68
      %p72 = pneg %p66
      %p73 = scmp.eq.s32.totalorder %s15, 1
      %p74 = por %p72, %p73
      %p75 = scmp.ne.s32.totalorder %s67, %s70
      %p76 = scmp.eq.s32.totalorder %s15, 0
      %p77 = por %p75, %p76
      %p78 = scmp.ne.s32.totalorder %s67, %s70
      %p79 = scmp.eq.s32.totalorder %s20, 1
      %p80 = por %p78, %p79
      %p81 = scmp.ne.s32.totalorder %s70, %s71
      %p82 = scmp.eq.s32.totalorder %s20, 0
      %p83 = por %p81, %p82
      %p84 = scmp.ne.s32.totalorder %s70, %s71
      %p85 = scmp.eq.s32.totalorder %s21, 1
      %p86 = por %p84, %p85
      %p88 = scmp.ne.s32.totalorder %s71, %s87
      %p89 = scmp.eq.s32.totalorder %s21, 0
      %p90 = por %p88, %p89
      %s91 = ssub.s32 %s22, %s34
      %p92 = scmp.eq.s32.totalorder %s91, 0
      %s94 = sadd.s32 %s93, 1
      %s95 = scalar_select %p92, %s93, %s94
      %p98 = pneg %p92
      %p99 = scmp.eq.s32.totalorder %s15, 1
      %p100 = por %p98, %p99
      %p101 = scmp.ne.s32.totalorder %s93, %s96
      %p102 = scmp.eq.s32.totalorder %s15, 0
      %p103 = por %p101, %p102
      %p104 = scmp.ne.s32.totalorder %s93, %s96
      %p105 = scmp.eq.s32.totalorder %s20, 1
      %p106 = por %p104, %p105
      %p107 = scmp.ne.s32.totalorder %s96, %s97
      %p108 = scmp.eq.s32.totalorder %s20, 0
      %p109 = por %p107, %p108
      %p110 = scmp.ne.s32.totalorder %s96, %s97
      %p111 = scmp.eq.s32.totalorder %s21, 1
      %p112 = por %p110, %p111
      %p114 = scmp.ne.s32.totalorder %s97, %s113
      %p115 = scmp.eq.s32.totalorder %s21, 0
      %p116 = por %p114, %p115
      %s117 = ssub.s32 %s22, %s34
      %s118 = ssub.s32 %s23, %s30
      %s119 = sor.u32 %s117, %s118
      %p120 = scmp.eq.s32.totalorder %s119, 0
      %s122 = sadd.s32 %s121, 1
      %s123 = scalar_select %p120, %s121, %s122
      %p126 = pneg %p120
      %p127 = scmp.eq.s32.totalorder %s15, 1
      %p128 = por %p126, %p127
      %p129 = scmp.ne.s32.totalorder %s121, %s124
      %p130 = scmp.eq.s32.totalorder %s15, 0
      %p131 = por %p129, %p130
      %p132 = scmp.ne.s32.totalorder %s121, %s124
      %p133 = scmp.eq.s32.totalorder %s20, 1
      %p134 = por %p132, %p133
      %p135 = scmp.ne.s32.totalorder %s124, %s125
      %p136 = scmp.eq.s32.totalorder %s20, 0
      %p137 = por %p135, %p136
      %p138 = scmp.ne.s32.totalorder %s124, %s125
      %p139 = scmp.eq.s32.totalorder %s21, 1
      %p140 = por %p138, %p139
      %p142 = scmp.ne.s32.totalorder %s125, %s141
      %p143 = scmp.eq.s32.totalorder %s21, 0
      %p144 = por %p142, %p143
      %p145 = scmp.le.s32.totalorder 1, %s15
      %p146 = scmp.lt.s32.totalorder %s15, 3
      %p147 = pnand %p145, %p146
      %p148 = pneg %p147
      // Predicated region
      $region9: #{tpu_custom_call.1} parent=5 // pred_check
        _
      $region10: #{tpu_custom_call.1} parent=5 // pred_check_branch
        %150 = sbr.rel (%p147) target = $region12
      $region11: #{tpu_custom_call.1} parent=5 // pred_region
        %s151 = ssub.s32 %s15, 1
      $region12: #{tpu_custom_call.1} parent=5 // pred_fallthru
        _
      %p152 = scmp.lt.s32.totalorder %s15, 2
      // Predicated region
      $region13: #{tpu_custom_call.1} parent=5 // pred_check
        %p153 = pneg %p152
      $region14: #{tpu_custom_call.1} parent=5 // pred_check_branch
        %155 = sbr.rel (%p153) target = $region16
      $region15: #{tpu_custom_call.1} parent=5 // pred_region
        // Predicated region
        $region17: #{tpu_custom_call.1} parent=15 // pred_check
          %p156 = pneg %p49
        $region18: #{tpu_custom_call.1} parent=15 // pred_check_branch
          %158 = sbr.rel (%p156) target = $region20
        $region19: #{tpu_custom_call.1} parent=15 // pred_region
          %s159 = sand.u32 %s39, 1
          %s160 = scalar_lea.sflag [#allocation3], %s159
          %s161 = sand.u32 %s39, 1
          %s162 = smul.addr %s161, 16
          %s163 = scalar_lea.vmem [#allocation2], %s162
          %s164 = smul.u32 2, %s23
          %s166 = ssub.s32 256, 256
          %167 = vsyncadd %s160, %s166
          %s168 = smul.addr %s22, 2
          %s169 = sadd.s32 %s164, %s168
          %s170 = smul.addr %s169, 128
          %s171 = scalar_lea.hbm %s0, %s170
          %s172 = sshll.u32 %s163, 4
          %s173 = int_to_ptr.vmem [resolvable:$true] %s172
          %178 = dma.hbm_to_vmem [thread:$0]  %s171, 256, %s173, %s160, 128, 128, 8
        $region20: #{tpu_custom_call.1} parent=15 // pred_fallthru
          _
        // Predicated region
        $region21: #{tpu_custom_call.1} parent=15 // pred_check
          %p179 = pneg %p77
        $region22: #{tpu_custom_call.1} parent=15 // pred_check_branch
          %181 = sbr.rel (%p179) target = $region24
        $region23: #{tpu_custom_call.1} parent=15 // pred_region
          %s182 = sand.u32 %s67, 1
          %s183 = scalar_lea.sflag [#allocation5], %s182
          %s184 = sand.u32 %s67, 1
          %s185 = smul.addr %s184, 16
          %s186 = scalar_lea.vmem [#allocation4], %s185
          %s187 = smul.u32 2, %s23
          %s189 = ssub.s32 256, 256
          %190 = vsyncadd %s183, %s189
          %s191 = smul.addr %s22, 2
          %s192 = sadd.s32 %s187, %s191
          %s193 = smul.addr %s192, 128
          %s194 = scalar_lea.hbm %s1, %s193
          %s195 = sshll.u32 %s186, 4
          %s196 = int_to_ptr.vmem [resolvable:$true] %s195
          %201 = dma.hbm_to_vmem [thread:$0]  %s194, 256, %s196, %s183, 128, 128, 8
        $region24: #{tpu_custom_call.1} parent=15 // pred_fallthru
          _
        // Predicated region
        $region25: #{tpu_custom_call.1} parent=15 // pred_check
          %p202 = pneg %p103
        $region26: #{tpu_custom_call.1} parent=15 // pred_check_branch
          %204 = sbr.rel (%p202) target = $region28
        $region27: #{tpu_custom_call.1} parent=15 // pred_region
          %p205 = scmp.lt.s32.totalorder %s22, 1
          %s206 = scalar_select %p205, %s22, 1
          %s207 = scalar_lea.vmem %s2, %s206
        $region28: #{tpu_custom_call.1} parent=15 // pred_fallthru
          _
      $region16: #{tpu_custom_call.1} parent=5 // pred_fallthru
        _
      %p208 = scmp.le.s32.totalorder 1, %s15
      %p209 = scmp.lt.s32.totalorder %s15, 3
      %p210 = pnand %p208, %p209
      %p211 = pneg %p210
      // Predicated region
      $region29: #{tpu_custom_call.1} parent=5 // pred_check
        _
      $region30: #{tpu_custom_call.1} parent=5 // pred_check_branch
        %213 = sbr.rel (%p210) target = $region32
      $region31: #{tpu_custom_call.1} parent=5 // pred_region
        %s214 = ssub.s32 %s15, 1
        %s215 = sand.u32 %s42, 1
        %s216 = scalar_lea.sflag [#allocation3], %s215
        %s217 = sand.u32 %s42, 1
        %s218 = smul.addr %s217, 16
        %s219 = scalar_lea.vmem [#allocation2], %s218
        // Predicated region
        $region33: #{tpu_custom_call.1} parent=31 // pred_check
          %p220 = pneg %p55
        $region34: #{tpu_custom_call.1} parent=31 // pred_check_branch
          %222 = sbr.rel (%p220) target = $region36
        $region35: #{tpu_custom_call.1} parent=31 // pred_region
          %223 = dma.done %s216, 256
        $region36: #{tpu_custom_call.1} parent=31 // pred_fallthru
          _
        %s224 = sand.u32 %s70, 1
        %s225 = scalar_lea.sflag [#allocation5], %s224
        %s226 = sand.u32 %s70, 1
        %s227 = smul.addr %s226, 16
        %s228 = scalar_lea.vmem [#allocation4], %s227
        // Predicated region
        $region37: #{tpu_custom_call.1} parent=31 // pred_check
          %p229 = pneg %p83
        $region38: #{tpu_custom_call.1} parent=31 // pred_check_branch
          %231 = sbr.rel (%p229) target = $region40
        $region39: #{tpu_custom_call.1} parent=31 // pred_region
          %232 = dma.done %s225, 256
        $region40: #{tpu_custom_call.1} parent=31 // pred_fallthru
          _
        %s233 = sand.u32 %s42, 1
        %s234 = scalar_lea.sflag [#allocation3], %s233
        %s235 = sand.u32 %s42, 1
        %s236 = smul.addr %s235, 16
        %s237 = scalar_lea.vmem [#allocation2], %s236
        %p238 = pneg %p55
        %p239 = pneg %p52
        %s240 = sand.u32 %s70, 1
        %s241 = scalar_lea.sflag [#allocation5], %s240
        %s242 = sand.u32 %s70, 1
        %s243 = smul.addr %s242, 16
        %s244 = scalar_lea.vmem [#allocation4], %s243
        %p245 = pneg %p83
        %p246 = pneg %p80
        %p247 = scmp.lt.s32.totalorder %s24, 1
        %s248 = scalar_select %p247, %s24, 1
        %s249 = scalar_lea.vmem %s2, %s248
        %p250 = pneg %p109
        %p251 = pneg %p106
        %p252 = pneg %p137
        %p253 = pneg %p134
        %p254 = scmp.lt.s32.totalorder %s24, 1
        %s255 = scalar_select %p254, %s24, 1
        %p256 = scmp.lt.s32.totalorder %s25, 0
        %s257 = scalar_select %p256, %s25, 0
        %s258 = sadd.s32 %s257, %s255
        %s259 = smul.addr %s258, 4
        %s260 = scalar_lea.vmem %s3, %s259
        %s261 = smul.u32 2, %s25
        %s262 = smul.u32 2, %s25
        %p263 = scmp.lt.s32.totalorder %s24, 1
        %s264 = scalar_select %p263, %s24, 1
        %s265 = scalar_lea.vmem %s2, %s264
        %p266 = scmp.lt.s32.totalorder %s24, 1
        %s267 = scalar_select %p266, %s24, 1
        %p268 = scmp.lt.s32.totalorder %s25, 0
        %s269 = scalar_select %p268, %s25, 0
        %s270 = sadd.s32 %s269, %s267
        %s271 = smul.addr %s270, 4
        %s272 = scalar_lea.vmem %s3, %s271
        %v273 = vld [vmem:[%s219] sm:$0xff]
        %v274 = vld [vmem:[%s219 + $0x8] sm:$0xff]
        %v275 = vld [vmem:[%s228] sm:$0xff]
        %v276 = vld [vmem:[%s228 + $0x8] sm:$0xff]
        %v277 = vld [vmem:[%s265] sm:$0x1]
        %v278 = vsub.f32 %v273, %v275
        %v279 = vsub.f32 %v274, %v276
        %v280 = vand.u32 2147483647, %v278
        %v281 = vand.u32 2147483647, %v279
        %v282 = vmul.f32 %v273, 1.442695
        %v283 = vpow.pop %v282
        %v284 = vmul.f32 %v274, 1.442695
        %v285 = vpow.pop %v284
        %v286 = vmul.f32 %v275, 1.442695
        %v287 = vpow.pop %v286
        %v288 = vmul.f32 %v276, 1.442695
        %v289 = vpow.pop %v288
        %v290 = vsub.f32 %v287, %v283
        %v291 = vsub.f32 %v289, %v285
        %v292 = vadd.f32 %v287, 1e-08
        %v293 = vadd.f32 %v289, 1e-08
        %v294 = vadd.f32 %v280, %v281
        %v295 = vrot.slane %v294, 4
        %v296 = vadd.f32 %v294, %v295
        %v297 = vrot.slane %v296, 2
        %v298 = vadd.f32 %v296, %v297
        %v299 = vrot.slane %v298, 1
        %v300 = vadd.f32 %v298, %v299
        %v301 = vmul.f32 %v300, %v277
        %v302 = vadd.f32 %v301, 0.0
        %v303 = vmul.f32 %v290, %v290
        %v304 = vmul.f32 %v291, %v291
        %v305 = vadd.f32 %v303, %v304
        %v306 = vrot.slane %v305, 4
        %v307 = vadd.f32 %v305, %v306
        %v308 = vrot.slane %v307, 2
        %v309 = vadd.f32 %v307, %v308
        %v310 = vrot.slane %v309, 1
        %v311 = vadd.f32 %v309, %v310
        %v312 = vmul.f32 %v311, %v277
        %v313 = vadd.f32 %v312, 0.0
        %v314 = vmul.f32 %v292, %v292
        %v315 = vmul.f32 %v293, %v293
        %v316 = vadd.f32 %v314, %v315
        %v317 = vrot.slane %v316, 4
        %v318 = vadd.f32 %v316, %v317
        %v319 = vrot.slane %v318, 2
        %v320 = vadd.f32 %v318, %v319
        %v321 = vrot.slane %v320, 1
        %v322 = vadd.f32 %v320, %v321
        %v323 = vmul.f32 %v322, %v277
        %v324 = vadd.f32 %v323, 0.0
        %v326 = vrot.slane %v313, 7
        %v329 = vrot.slane %v324, 6
        %vm331 = vcmask 1040384
        %v332 = vsel %vm331, %v302, %v326
        %vm333 = vcmask 1041408
        %v334 = vsel %vm333, %v332, %v329
        %335 = vst [vmem:[%s272] sm:$0x7] %v334
        %p336 = scmp.lt.s32.totalorder %s24, 1
        %s337 = scalar_select %p336, %s24, 1
        %p338 = scmp.lt.s32.totalorder %s25, 0
        %s339 = scalar_select %p338, %s25, 0
        %s340 = sadd.s32 %s339, %s337
        %s341 = smul.addr %s340, 4
        %s342 = scalar_lea.vmem %s3, %s341
        // Predicated region
        $region41: #{tpu_custom_call.1} parent=31 // pred_check
          %p343 = pneg %p134
        $region42: #{tpu_custom_call.1} parent=31 // pred_check_branch
          %345 = sbr.rel (%p343) target = $region44
        $region43: #{tpu_custom_call.1} parent=31 // pred_region
          _
        $region44: #{tpu_custom_call.1} parent=31 // pred_fallthru
          _
      $region32: #{tpu_custom_call.1} parent=5 // pred_fallthru
        _
      %p346 = scmp.le.s32.totalorder 2, %s15
      // Predicated region
      $region45: #{tpu_custom_call.1} parent=5 // pred_check
        %p347 = pneg %p346
      $region46: #{tpu_custom_call.1} parent=5 // pred_check_branch
        %349 = sbr.rel (%p347) target = $region48
      $region47: #{tpu_custom_call.1} parent=5 // pred_region
        %s350 = ssub.s32 %s15, 2
        // Predicated region
        $region49: #{tpu_custom_call.1} parent=47 // pred_check
          %p351 = pneg %p140
        $region50: #{tpu_custom_call.1} parent=47 // pred_check_branch
          %353 = sbr.rel (%p351) target = $region52
        $region51: #{tpu_custom_call.1} parent=47 // pred_region
          %p354 = scmp.lt.s32.totalorder %s26, 1
          %s355 = scalar_select %p354, %s26, 1
          %p356 = scmp.lt.s32.totalorder %s27, 0
          %s357 = scalar_select %p356, %s27, 0
          %s358 = sadd.s32 %s357, %s355
          %s359 = smul.addr %s358, 4
          %s360 = scalar_lea.vmem %s3, %s359
        $region52: #{tpu_custom_call.1} parent=47 // pred_fallthru
          _
      $region48: #{tpu_custom_call.1} parent=5 // pred_fallthru
        _
    $region6: #{tpu_custom_call.1} parent=1 // loop_footer
      %s19 = sadd.s32 1, %s15
    $region7: #{tpu_custom_call.1} parent=1 // loop_footer_branch
      %14 = sbr.rel target = $region3
    $region8: #{tpu_custom_call.1} parent=1 // loop_exit
      _
    %361 = vsyncpa [#allocation3], 1
    %s362 = scalar_lea.sflag [#allocation3], 1
    %363 = vsyncpa %s362, 1
    %364 = vsyncpa [#allocation5], 1
    %s365 = scalar_lea.sflag [#allocation5], 1
    %366 = vsyncpa %s365, 1

</llo_original>
